<compile_context>
chip_gen: v5e
topology: v5e:2x2
jax: 0.10.0
libtpu: 0.0.40
codegen_flags: <defaults>
</compile_context>

<pallas_src>
import jax
import jax.numpy as jnp
from jax.experimental import pallas as pl
from jax.experimental.pallas import tpu as pltpu

LANE = 128
SUBLANE = 8


def _round_up(x, m):
    return (x + m - 1) // m * m


# ----------------------------------------------------------------------------
# Fused MLP kernel: all layers inside one kernel body (static unroll over layers).
# ----------------------------------------------------------------------------
def _make_fused_mlp_kernel(n_hidden):
    def kernel(*refs):
        # refs = (x, w0, b0, w1, b1, ..., w_out, b_out, o)
        x_ref = refs[0]
        o_ref = refs[-1]
        wb = refs[1:-1]
        h = x_ref[...]                                         # (block_b, Din_p) bf16
        for l in range(n_hidden):                              # static unroll, L is tiny
            z = jnp.dot(h, wb[2 * l][...],
                        preferred_element_type=jnp.float32)    # MXU, f32 accumulator
            z = z + wb[2 * l + 1][...]                         # bias-add in f32 (hoisted once)
            h = jnp.maximum(z, 0.0).astype(jnp.bfloat16)       # ReLU in f32 -> bf16 for next MXU
        z = jnp.dot(h, wb[2 * n_hidden][...],
                    preferred_element_type=jnp.float32)        # (block_b, 128)
        o_ref[...] = z + wb[2 * n_hidden + 1][...]             # real output is column 0
    return kernel


def _choose_block_b(batch):
    bp = _round_up(batch, SUBLANE)
    if bp >= 512:
        return 256                                   # v6e: 2x256 MXU-friendly, amortize step cost
    if bp > SUBLANE:
        return _round_up(pl.cdiv(bp, 2), SUBLANE)    # >=2 grid steps -> both TCs on v7x
    return SUBLANE


def general_nn_forward(x, ws_p, bs_p, *, single_buffer_weights=True):
    """x: (B, D) f32.  ws_p/bs_p: per-layer padded bf16 weights / f32 biases (hidden..., out)."""
    B, D = x.shape
    n_hidden = len(ws_p) - 1
    din_p = ws_p[0].shape[0]
    dout_last_p = ws_p[-1].shape[1]                  # 128 (padded width-1 output layer)

    block_b = _choose_block_b(B)
    Bp = _round_up(_round_up(B, SUBLANE), block_b)
    grid = (Bp // block_b,)

    # Input padded only to its own lane multiple (not the global max feature dim).
    x_pad = jnp.zeros((Bp, din_p), jnp.bfloat16).at[:B, :D].set(x.astype(jnp.bfloat16))

    # --- BlockSpecs ---------------------------------------------------------
    in_specs = [pl.BlockSpec((block_b, din_p), lambda i: (i, 0))]
    flat_params = []
    for w, b in zip(ws_p, bs_p):
        for arr in (w, b):
            if single_buffer_weights:
                # Grid-invariant block: nothing to prefetch -> single VMEM copy instead of
                # the default double buffer (halves weight residency).
                spec = pl.BlockSpec(arr.shape, lambda i: (0, 0),
                                    pipeline_mode=pl.Buffered(1))
            else:
                spec = pl.BlockSpec(arr.shape, lambda i: (0, 0))
            in_specs.append(spec)
            flat_params.append(arr)
    out_specs = pl.BlockSpec((block_b, dout_last_p), lambda i: (i, 0))

    # --- cost / VMEM hints --------------------------------------------------
    flops = 2 * Bp * sum(int(w.shape[0]) * int(w.shape[1]) for w in ws_p)
    param_bytes = sum(int(a.size) * a.dtype.itemsize for a in flat_params)
    act_bytes = int(x_pad.size) * 2 + Bp * dout_last_p * 4
    weight_vmem = param_bytes * (1 if single_buffer_weights else 2)
    needed_vmem = (weight_vmem
                   + 2 * block_b * din_p * 2           # double-buffered input tiles (bf16)
                   + 2 * block_b * dout_last_p * 4)    # double-buffered output tiles (f32)
    vmem_limit = int(min(96 * 2**20, max(32 * 2**20, 2 * needed_vmem)))

    out = pl.pallas_call(
        _make_fused_mlp_kernel(n_hidden),
        out_shape=jax.ShapeDtypeStruct((Bp, dout_last_p), jnp.float32),
        grid=grid,
        in_specs=in_specs,
        out_specs=out_specs,
        compiler_params=pltpu.CompilerParams(
            dimension_semantics=("parallel",),          # batch axis -> both TCs on v7x
            vmem_limit_bytes=vmem_limit,
        ),
        cost_estimate=pl.CostEstimate(
            flops=flops, transcendentals=0,
            bytes_accessed=param_bytes + act_bytes),
    )(x_pad, *flat_params)
    return out[:B, :1]                                  # real result lives in column 0


# ----------------------------------------------------------------------------
# Parameter init (mimics GeneralNN.__init__ shapes) + one-time fold/pad/cast.
# ----------------------------------------------------------------------------
def init_params(key, input_dim, hidden_sizes):
    params = {"hidden": [], "out": None}
    d_in = input_dim
    for h in hidden_sizes:
        key, kw, kb, kg, kbeta, km, kv = jax.random.split(key, 7)
        bound = 1.0 / jnp.sqrt(d_in)
        w = jax.random.uniform(kw, (d_in, h), jnp.float32, -bound, bound)   # Linear weight (in,out)
        b = jax.random.uniform(kb, (h,), jnp.float32, -bound, bound)        # Linear bias
        gamma = 1.0 + 0.1 * jax.random.normal(kg, (h,), jnp.float32)        # BN weight
        beta = 0.1 * jax.random.normal(kbeta, (h,), jnp.float32)            # BN bias
        running_mean = 0.1 * jax.random.normal(km, (h,), jnp.float32)
        running_var = 1.0 + 0.1 * jax.random.uniform(kv, (h,), jnp.float32)
        params["hidden"].append(
            dict(w=w, b=b, gamma=gamma, beta=beta, mean=running_mean, var=running_var))
        d_in = h
    key, kw, kb = jax.random.split(key, 3)
    bound = 1.0 / jnp.sqrt(d_in)
    params["out"] = dict(
        w=jax.random.uniform(kw, (d_in, 1), jnp.float32, -bound, bound),
        b=jax.random.uniform(kb, (1,), jnp.float32, -bound, bound))
    return params


def prepare_fused_params(params, eps=1e-5):
    """Fold eval-mode BN + bias into each hidden Linear, pad EACH layer independently to
    (round_up(in,128), round_up(out,128)), weights -> bf16, biases stay f32.  Done ONCE."""
    ws, bs = [], []
    for layer in params["hidden"]:
        scale = layer["gamma"] / jnp.sqrt(layer["var"] + eps)                 # (h,)
        ws.append(layer["w"] * scale[None, :])                                # fold BN scale
        bs.append(layer["b"] * scale + (layer["beta"] - layer["mean"] * scale))  # fold BN shift
    ws.append(params["out"]["w"])
    bs.append(params["out"]["b"])

    ws_p, bs_p = [], []
    for w, b in zip(ws, bs):
        din_p = _round_up(w.shape[0], LANE)
        dout_p = _round_up(w.shape[1], LANE)
        wp = jnp.zeros((din_p, dout_p), jnp.float32).at[: w.shape[0], : w.shape[1]].set(w)
        bp = jnp.zeros((1, dout_p), jnp.float32).at[0, : b.shape[0]].set(b)
        ws_p.append(wp.astype(jnp.bfloat16))   # padded rows/cols stay exactly zero
        bs_p.append(bp)                        # f32 bias, added to f32 accumulator
    return ws_p, bs_p


# Pure-JAX reference (eval mode) for a self-check.
def general_nn_reference(params, x, eps=1e-5):
    for layer in params["hidden"]:
        z = x @ layer["w"] + layer["b"]
        z = layer["gamma"] * (z - layer["mean"]) / jnp.sqrt(layer["var"] + eps) + layer["beta"]
        x = jnp.maximum(z, 0.0)
    return x @ params["out"]["w"] + params["out"]["b"]


# ----------------------------------------------------------------------------
if __name__ == "__main__":
    key = jax.random.PRNGKey(0)
    key, kx, kp = jax.random.split(key, 3)

    batch = 16
    input_dim = 32
    hidden_sizes = [64, 32]
    dropout_rate = 0.5  # identity in eval mode

    x = jax.random.normal(kx, (batch, input_dim), jnp.float32)
    params = init_params(kp, input_dim, hidden_sizes)

    # One-time fold of BN/bias into weights + per-layer padding + bf16 cast.
    ws_p, bs_p = prepare_fused_params(params)

    fwd = jax.jit(general_nn_forward, static_argnames=("single_buffer_weights",))
    try:
        out = jax.block_until_ready(fwd(x, ws_p, bs_p, single_buffer_weights=True))
    except Exception:
        # Fallback if this JAX build rejects pipeline_mode=pl.Buffered(1) on pallas_call
        # BlockSpecs: identical kernel with default (double-buffered) weight blocks.
        out = jax.block_until_ready(fwd(x, ws_p, bs_p, single_buffer_weights=False))

    ref = general_nn_reference(params, x)
    assert out.shape == (batch, 1), out.shape
    # bf16 weights/activations with f32 accumulation -> loosened tolerance vs f32 reference.
    assert jnp.allclose(out, ref, atol=5e-2, rtol=5e-2), float(jnp.max(jnp.abs(out - ref)))

    print("KERNEL_OK")
</pallas_src>

<mosaic_0001>
module attributes {stable_mosaic.version = 11 : i64} {
  func.func @kernel(%arg0: i32, %arg1: memref<8x128xbf16, #tpu.memory_space<vmem>>, %arg2: memref<128x128xbf16, #tpu.memory_space<vmem>>, %arg3: memref<1x128xf32, #tpu.memory_space<vmem>>, %arg4: memref<128x128xbf16, #tpu.memory_space<vmem>>, %arg5: memref<1x128xf32, #tpu.memory_space<vmem>>, %arg6: memref<128x128xbf16, #tpu.memory_space<vmem>>, %arg7: memref<1x128xf32, #tpu.memory_space<vmem>>, %arg8: memref<8x128xf32, #tpu.memory_space<vmem>>) attributes {dimension_semantics = [#tpu.dimension_semantics<parallel>], iteration_bounds = array<i64: 2>, scalar_prefetch = 0 : i64, scratch_operands = 0 : i64, tpu.core_type = #tpu.core_type<tc>, window_params = [{transform_indices = @transform_0, window_bounds = array<i64: 8, 128>}, {pipeline_mode = #tpu.pipeline_mode<synchronous>, transform_indices = @transform_1, window_bounds = array<i64: 128, 128>}, {pipeline_mode = #tpu.pipeline_mode<synchronous>, transform_indices = @transform_2, window_bounds = array<i64: 1, 128>}, {pipeline_mode = #tpu.pipeline_mode<synchronous>, transform_indices = @transform_3, window_bounds = array<i64: 128, 128>}, {pipeline_mode = #tpu.pipeline_mode<synchronous>, transform_indices = @transform_4, window_bounds = array<i64: 1, 128>}, {pipeline_mode = #tpu.pipeline_mode<synchronous>, transform_indices = @transform_5, window_bounds = array<i64: 128, 128>}, {pipeline_mode = #tpu.pipeline_mode<synchronous>, transform_indices = @transform_6, window_bounds = array<i64: 1, 128>}, {transform_indices = @transform_7, window_bounds = array<i64: 8, 128>}]} {
    %c0 = arith.constant 0 : index
    %c0_0 = arith.constant 0 : index
    %0 = vector.load %arg1[%c0, %c0_0] : memref<8x128xbf16, #tpu.memory_space<vmem>>, vector<8x128xbf16>
    %c0_1 = arith.constant 0 : index
    %c0_2 = arith.constant 0 : index
    %1 = vector.load %arg2[%c0_1, %c0_2] : memref<128x128xbf16, #tpu.memory_space<vmem>>, vector<128x128xbf16>
    %cst = arith.constant dense<0.000000e+00> : vector<8x128xf32>
    %2 = tpu.matmul %0, %1, %cst {dimension_numbers = #tpu.dot_dimension_numbers<[1], [0], [0], [1], [0, 0, 1, 1], [], []>} : vector<8x128xbf16>, vector<128x128xbf16>, vector<8x128xf32> -> vector<8x128xf32>
    %c0_3 = arith.constant 0 : index
    %c0_4 = arith.constant 0 : index
    %3 = vector.load %arg3[%c0_3, %c0_4] : memref<1x128xf32, #tpu.memory_space<vmem>>, vector<1x128xf32>
    %4 = vector.broadcast %3 : vector<1x128xf32> to vector<8x128xf32>
    %5 = arith.addf %2, %4 : vector<8x128xf32>
    %cst_5 = arith.constant 0.000000e+00 : f32
    %6 = vector.broadcast %cst_5 : f32 to vector<8x128xf32>
    %7 = arith.maximumf %5, %6 : vector<8x128xf32>
    %8 = arith.truncf %7 : vector<8x128xf32> to vector<8x128xbf16>
    %c0_6 = arith.constant 0 : index
    %c0_7 = arith.constant 0 : index
    %9 = vector.load %arg4[%c0_6, %c0_7] : memref<128x128xbf16, #tpu.memory_space<vmem>>, vector<128x128xbf16>
    %cst_8 = arith.constant dense<0.000000e+00> : vector<8x128xf32>
    %10 = tpu.matmul %8, %9, %cst_8 {dimension_numbers = #tpu.dot_dimension_numbers<[1], [0], [0], [1], [0, 0, 1, 1], [], []>} : vector<8x128xbf16>, vector<128x128xbf16>, vector<8x128xf32> -> vector<8x128xf32>
    %c0_9 = arith.constant 0 : index
    %c0_10 = arith.constant 0 : index
    %11 = vector.load %arg5[%c0_9, %c0_10] : memref<1x128xf32, #tpu.memory_space<vmem>>, vector<1x128xf32>
    %12 = vector.broadcast %11 : vector<1x128xf32> to vector<8x128xf32>
    %13 = arith.addf %10, %12 : vector<8x128xf32>
    %cst_11 = arith.constant 0.000000e+00 : f32
    %14 = vector.broadcast %cst_11 : f32 to vector<8x128xf32>
    %15 = arith.maximumf %13, %14 : vector<8x128xf32>
    %16 = arith.truncf %15 : vector<8x128xf32> to vector<8x128xbf16>
    %c0_12 = arith.constant 0 : index
    %c0_13 = arith.constant 0 : index
    %17 = vector.load %arg6[%c0_12, %c0_13] : memref<128x128xbf16, #tpu.memory_space<vmem>>, vector<128x128xbf16>
    %cst_14 = arith.constant dense<0.000000e+00> : vector<8x128xf32>
    %18 = tpu.matmul %16, %17, %cst_14 {dimension_numbers = #tpu.dot_dimension_numbers<[1], [0], [0], [1], [0, 0, 1, 1], [], []>} : vector<8x128xbf16>, vector<128x128xbf16>, vector<8x128xf32> -> vector<8x128xf32>
    %c0_15 = arith.constant 0 : index
    %c0_16 = arith.constant 0 : index
    %19 = vector.load %arg7[%c0_15, %c0_16] : memref<1x128xf32, #tpu.memory_space<vmem>>, vector<1x128xf32>
    %20 = vector.broadcast %19 : vector<1x128xf32> to vector<8x128xf32>
    %21 = arith.addf %18, %20 : vector<8x128xf32>
    %c0_17 = arith.constant 0 : index
    %c0_18 = arith.constant 0 : index
    %22 = vector.load %arg8[%c0_17, %c0_18] : memref<8x128xf32, #tpu.memory_space<vmem>>, vector<8x128xf32>
    tpu.vector_store %arg8[%c0_17, %c0_18], %21 {strides = array<i32>} : memref<8x128xf32, #tpu.memory_space<vmem>>, vector<8x128xf32>,
    return
  }
  func.func @transform_0(%arg0: i32) -> (i32, i32) {
    %c0_i32 = arith.constant 0 : i32
    %c0_i32_0 = arith.constant 0 : i32
    return %arg0, %c0_i32 : i32, i32
  }
  func.func @transform_1(%arg0: i32) -> (i32, i32) {
    %c0_i32 = arith.constant 0 : i32
    %c0_i32_0 = arith.constant 0 : i32
    %c0_i32_1 = arith.constant 0 : i32
    return %c0_i32, %c0_i32_0 : i32, i32
  }
  func.func @transform_2(%arg0: i32) -> (i32, i32) {
    %c0_i32 = arith.constant 0 : i32
    %c0_i32_0 = arith.constant 0 : i32
    %c0_i32_1 = arith.constant 0 : i32
    return %c0_i32, %c0_i32_0 : i32, i32
  }
  func.func @transform_3(%arg0: i32) -> (i32, i32) {
    %c0_i32 = arith.constant 0 : i32
    %c0_i32_0 = arith.constant 0 : i32
    %c0_i32_1 = arith.constant 0 : i32
    return %c0_i32, %c0_i32_0 : i32, i32
  }
  func.func @transform_4(%arg0: i32) -> (i32, i32) {
    %c0_i32 = arith.constant 0 : i32
    %c0_i32_0 = arith.constant 0 : i32
    %c0_i32_1 = arith.constant 0 : i32
    return %c0_i32, %c0_i32_0 : i32, i32
  }
  func.func @transform_5(%arg0: i32) -> (i32, i32) {
    %c0_i32 = arith.constant 0 : i32
    %c0_i32_0 = arith.constant 0 : i32
    %c0_i32_1 = arith.constant 0 : i32
    return %c0_i32, %c0_i32_0 : i32, i32
  }
  func.func @transform_6(%arg0: i32) -> (i32, i32) {
    %c0_i32 = arith.constant 0 : i32
    %c0_i32_0 = arith.constant 0 : i32
    %c0_i32_1 = arith.constant 0 : i32
    return %c0_i32, %c0_i32_0 : i32, i32
  }
  func.func @transform_7(%arg0: i32) -> (i32, i32) {
    %c0_i32 = arith.constant 0 : i32
    %c0_i32_0 = arith.constant 0 : i32
    return %arg0, %c0_i32 : i32, i32
  }
}

module attributes {stable_mosaic.version = 11 : i64} {
  func.func @kernel(%arg0: i32, %arg1: memref<8x128xbf16, #tpu.memory_space<vmem>>, %arg2: memref<128x128xbf16, #tpu.memory_space<vmem>>, %arg3: memref<1x128xf32, #tpu.memory_space<vmem>>, %arg4: memref<128x128xbf16, #tpu.memory_space<vmem>>, %arg5: memref<1x128xf32, #tpu.memory_space<vmem>>, %arg6: memref<128x128xbf16, #tpu.memory_space<vmem>>, %arg7: memref<1x128xf32, #tpu.memory_space<vmem>>, %arg8: memref<8x128xf32, #tpu.memory_space<vmem>>) attributes {dimension_semantics = [#tpu.dimension_semantics<parallel>], iteration_bounds = array<i64: 2>, scalar_prefetch = 0 : i64, scratch_operands = 0 : i64, tpu.core_type = #tpu.core_type<tc>, window_params = [{transform_indices = @transform_0, window_bounds = array<i64: 8, 128>}, {pipeline_mode = #tpu.pipeline_mode<synchronous>, transform_indices = @transform_1, window_bounds = array<i64: 128, 128>}, {pipeline_mode = #tpu.pipeline_mode<synchronous>, transform_indices = @transform_2, window_bounds = array<i64: 1, 128>}, {pipeline_mode = #tpu.pipeline_mode<synchronous>, transform_indices = @transform_3, window_bounds = array<i64: 128, 128>}, {pipeline_mode = #tpu.pipeline_mode<synchronous>, transform_indices = @transform_4, window_bounds = array<i64: 1, 128>}, {pipeline_mode = #tpu.pipeline_mode<synchronous>, transform_indices = @transform_5, window_bounds = array<i64: 128, 128>}, {pipeline_mode = #tpu.pipeline_mode<synchronous>, transform_indices = @transform_6, window_bounds = array<i64: 1, 128>}, {transform_indices = @transform_7, window_bounds = array<i64: 8, 128>}]} {
    %c0 = arith.constant 0 : index
    %c0_0 = arith.constant 0 : index
    %0 = vector.load %arg1[%c0, %c0_0] : memref<8x128xbf16, #tpu.memory_space<vmem>>, vector<8x128xbf16>
    %c0_1 = arith.constant 0 : index
    %c0_2 = arith.constant 0 : index
    %1 = vector.load %arg2[%c0_1, %c0_2] : memref<128x128xbf16, #tpu.memory_space<vmem>>, vector<128x128xbf16>
    %cst = arith.constant dense<0.000000e+00> : vector<8x128xf32>
    %2 = tpu.matmul %0, %1, %cst {dimension_numbers = #tpu.dot_dimension_numbers<[1], [0], [0], [1], [0, 0, 1, 1], [], []>} : vector<8x128xbf16>, vector<128x128xbf16>, vector<8x128xf32> -> vector<8x128xf32>
    %c0_3 = arith.constant 0 : index
    %c0_4 = arith.constant 0 : index
    %3 = vector.load %arg3[%c0_3, %c0_4] : memref<1x128xf32, #tpu.memory_space<vmem>>, vector<1x128xf32>
    %4 = vector.broadcast %3 : vector<1x128xf32> to vector<8x128xf32>
    %5 = arith.addf %2, %4 : vector<8x128xf32>
    %cst_5 = arith.constant 0.000000e+00 : f32
    %6 = vector.broadcast %cst_5 : f32 to vector<8x128xf32>
    %7 = arith.maximumf %5, %6 : vector<8x128xf32>
    %8 = arith.truncf %7 : vector<8x128xf32> to vector<8x128xbf16>
    %c0_6 = arith.constant 0 : index
    %c0_7 = arith.constant 0 : index
    %9 = vector.load %arg4[%c0_6, %c0_7] : memref<128x128xbf16, #tpu.memory_space<vmem>>, vector<128x128xbf16>
    %cst_8 = arith.constant dense<0.000000e+00> : vector<8x128xf32>
    %10 = tpu.matmul %8, %9, %cst_8 {dimension_numbers = #tpu.dot_dimension_numbers<[1], [0], [0], [1], [0, 0, 1, 1], [], []>} : vector<8x128xbf16>, vector<128x128xbf16>, vector<8x128xf32> -> vector<8x128xf32>
    %c0_9 = arith.constant 0 : index
    %c0_10 = arith.constant 0 : index
    %11 = vector.load %arg5[%c0_9, %c0_10] : memref<1x128xf32, #tpu.memory_space<vmem>>, vector<1x128xf32>
    %12 = vector.broadcast %11 : vector<1x128xf32> to vector<8x128xf32>
    %13 = arith.addf %10, %12 : vector<8x128xf32>
    %cst_11 = arith.constant 0.000000e+00 : f32
    %14 = vector.broadcast %cst_11 : f32 to vector<8x128xf32>
    %15 = arith.maximumf %13, %14 : vector<8x128xf32>
    %16 = arith.truncf %15 : vector<8x128xf32> to vector<8x128xbf16>
    %c0_12 = arith.constant 0 : index
    %c0_13 = arith.constant 0 : index
    %17 = vector.load %arg6[%c0_12, %c0_13] : memref<128x128xbf16, #tpu.memory_space<vmem>>, vector<128x128xbf16>
    %cst_14 = arith.constant dense<0.000000e+00> : vector<8x128xf32>
    %18 = tpu.matmul %16, %17, %cst_14 {dimension_numbers = #tpu.dot_dimension_numbers<[1], [0], [0], [1], [0, 0, 1, 1], [], []>} : vector<8x128xbf16>, vector<128x128xbf16>, vector<8x128xf32> -> vector<8x128xf32>
    %c0_15 = arith.constant 0 : index
    %c0_16 = arith.constant 0 : index
    %19 = vector.load %arg7[%c0_15, %c0_16] : memref<1x128xf32, #tpu.memory_space<vmem>>, vector<1x128xf32>
    %20 = vector.broadcast %19 : vector<1x128xf32> to vector<8x128xf32>
    %21 = arith.addf %18, %20 : vector<8x128xf32>
    %c0_17 = arith.constant 0 : index
    %c0_18 = arith.constant 0 : index
    %22 = vector.load %arg8[%c0_17, %c0_18] : memref<8x128xf32, #tpu.memory_space<vmem>>, vector<8x128xf32>
    tpu.vector_store %arg8[%c0_17, %c0_18], %21 {strides = array<i32>} : memref<8x128xf32, #tpu.memory_space<vmem>>, vector<8x128xf32>,
    return
  }
  func.func @transform_0(%arg0: i32) -> (i32, i32) {
    %c0_i32 = arith.constant 0 : i32
    %c0_i32_0 = arith.constant 0 : i32
    return %arg0, %c0_i32 : i32, i32
  }
  func.func @transform_1(%arg0: i32) -> (i32, i32) {
    %c0_i32 = arith.constant 0 : i32
    %c0_i32_0 = arith.constant 0 : i32
    %c0_i32_1 = arith.constant 0 : i32
    return %c0_i32, %c0_i32_0 : i32, i32
  }
  func.func @transform_2(%arg0: i32) -> (i32, i32) {
    %c0_i32 = arith.constant 0 : i32
    %c0_i32_0 = arith.constant 0 : i32
    %c0_i32_1 = arith.constant 0 : i32
    return %c0_i32, %c0_i32_0 : i32, i32
  }
  func.func @transform_3(%arg0: i32) -> (i32, i32) {
    %c0_i32 = arith.constant 0 : i32
    %c0_i32_0 = arith.constant 0 : i32
    %c0_i32_1 = arith.constant 0 : i32
    return %c0_i32, %c0_i32_0 : i32, i32
  }
  func.func @transform_4(%arg0: i32) -> (i32, i32) {
    %c0_i32 = arith.constant 0 : i32
    %c0_i32_0 = arith.constant 0 : i32
    %c0_i32_1 = arith.constant 0 : i32
    return %c0_i32, %c0_i32_0 : i32, i32
  }
  func.func @transform_5(%arg0: i32) -> (i32, i32) {
    %c0_i32 = arith.constant 0 : i32
    %c0_i32_0 = arith.constant 0 : i32
    %c0_i32_1 = arith.constant 0 : i32
    return %c0_i32, %c0_i32_0 : i32, i32
  }
  func.func @transform_6(%arg0: i32) -> (i32, i32) {
    %c0_i32 = arith.constant 0 : i32
    %c0_i32_0 = arith.constant 0 : i32
    %c0_i32_1 = arith.constant 0 : i32
    return %c0_i32, %c0_i32_0 : i32, i32
  }
  func.func @transform_7(%arg0: i32) -> (i32, i32) {
    %c0_i32 = arith.constant 0 : i32
    %c0_i32_0 = arith.constant 0 : i32
    return %arg0, %c0_i32 : i32, i32
  }
}

</mosaic_0001>

<llo_original>
// kernel: general_nn_forward.1
$region0: #{general_nn_forward.1}
  #allocation0 [shape = 'u32[]', space=smem, size = 0x4, offset = 0x4, fixed_abs, tag = 'smem constant byte address 0x4 - core index']
  #allocation1 [shape = 'u32[72,128]{1,0:T(1,128)}', space=vmem, size = 0x9000, scoped, tag = 'internal scratch']
  %s0 = inlined_call_operand.vmem [shape: bf16[16,128], index: 0, kind: input, shape index: {}]
  %s1 = inlined_call_operand.hbm [shape: bf16[128,128], index: 1, kind: input, shape index: {}]
  %s2 = inlined_call_operand.vmem [shape: f32[1,128], index: 2, kind: input, shape index: {}]
  %s3 = inlined_call_operand.hbm [shape: bf16[128,128], index: 3, kind: input, shape index: {}]
  %s4 = inlined_call_operand.vmem [shape: f32[1,128], index: 4, kind: input, shape index: {}]
  %s5 = inlined_call_operand.hbm [shape: bf16[128,128], index: 5, kind: input, shape index: {}]
  %s6 = inlined_call_operand.vmem [shape: f32[1,128], index: 6, kind: input, shape index: {}]
  %s7 = inlined_call_operand.vmem [shape: f32[16,128], index: 7, kind: output, shape index: {}]
  %s8 = sld [smem:[#allocation0]]
  $region73: #{general_nn_forward.1} parent=0
    _
  %s10 = ssub.s32 1, %s8
  %s11 = scalar_select 0, %s10, %s8
  $region1: #{general_nn_forward.1} parent=0
    #allocation2 [shape = 'u8[32768]{0}', space=vmem, size = 0x8000, scoped, tag = 'input window, operand 1, single buffered']
    #allocation3 [shape = 's32[2]{0}', space=sflag, size = 0x8, scoped, tag = 'scoped memory for general_nn_forward.1']
    #allocation4 [shape = 'u8[32768]{0}', space=vmem, size = 0x8000, scoped, tag = 'input window, operand 3, single buffered']
    #allocation5 [shape = 's32[1]{0}', space=sflag, size = 0x4, scoped, tag = 'scoped memory for general_nn_forward.1']
    #allocation6 [shape = 'u8[32768]{0}', space=vmem, size = 0x8000, scoped, tag = 'input window, operand 5, single buffered']
    %12 = vsyncpa [#allocation3], 0
    %13 = vsyncpa [#allocation5], 0
    loop: start=0, step=1, limit=4
    $region2: #{general_nn_forward.1} parent=1 // loop_pre_header
      _
    $region3: #{general_nn_forward.1} parent=1 // loop_header
      %s15 = sphi 0, %s19
      %p16 = scmp.ge.s32.totalorder %s15, 4
      %s25 = sphi 0, %s27
      %s28 = sphi 0, %s25
      %s29 = sphi 0, %s28
      %s45 = sphi 0, %s29
      %s49 = sphi 0, %s49
      %s51 = sphi 0, %s49
      %s52 = sphi 0, %s51
      %s66 = sphi 0, %s52
      %s70 = sphi 0, %s70
      %s72 = sphi 0, %s70
      %s73 = sphi 0, %s72
      %s87 = sphi 0, %s73
      %s91 = sphi 0, %s91
      %s93 = sphi 0, %s91
      %s94 = sphi 0, %s93
      %s108 = sphi 0, %s94
      %s112 = sphi 0, %s112
      %s114 = sphi 0, %s112
      %s115 = sphi 0, %s114
      %s129 = sphi 0, %s115
      %s133 = sphi 0, %s133
      %s135 = sphi 0, %s133
      %s136 = sphi 0, %s135
      %s150 = sphi 0, %s136
      %s154 = sphi 0, %s154
      %s156 = sphi 0, %s154
      %s157 = sphi 0, %s156
      %s171 = sphi 0, %s157
      %s177 = sphi 0, %s179
      %s180 = sphi 0, %s177
      %s181 = sphi 0, %s180
      %s197 = sphi 0, %s181
    $region4: #{general_nn_forward.1} parent=1 // loop_header_branch
      %18 = sbr.rel (%p16) target = $region8
    $region5: #{general_nn_forward.1} parent=1 // loop_body
      %s20 = ssub.s32 %s15, 1
      %s21 = ssub.s32 %s15, 2
      %s22 = sadd.s32 %s15, 1
      %s23 = ssub.s32 %s15, %s22
      %p24 = scmp.eq.s32.totalorder %s23, 0
      %s26 = sadd.s32 %s25, 1
      %s27 = scalar_select %p24, %s25, %s26
      %p30 = pneg %p24
      %p31 = scmp.eq.s32.totalorder %s15, 1
      %p32 = por %p30, %p31
      %p33 = scmp.ne.s32.totalorder %s25, %s28
      %p34 = scmp.eq.s32.totalorder %s15, 0
      %p35 = por %p33, %p34
      %p36 = scmp.ne.s32.totalorder %s25, %s28
      %p37 = scmp.eq.s32.totalorder %s20, 1
      %p38 = por %p36, %p37
      %p39 = scmp.ne.s32.totalorder %s28, %s29
      %p40 = scmp.eq.s32.totalorder %s20, 0
      %p41 = por %p39, %p40
      %p42 = scmp.ne.s32.totalorder %s28, %s29
      %p43 = scmp.eq.s32.totalorder %s21, 1
      %p44 = por %p42, %p43
      %p46 = scmp.ne.s32.totalorder %s29, %s45
      %p47 = scmp.eq.s32.totalorder %s21, 0
      %p48 = por %p46, %p47
      %s50 = sadd.s32 %s49, 1
      %p53 = scmp.eq.s32.totalorder %s15, 1
      %p54 = scmp.ne.s32.totalorder %s49, %s51
      %p55 = scmp.eq.s32.totalorder %s15, 0
      %p56 = por %p54, %p55
      %p57 = scmp.ne.s32.totalorder %s49, %s51
      %p58 = scmp.eq.s32.totalorder %s20, 1
      %p59 = por %p57, %p58
      %p60 = scmp.ne.s32.totalorder %s51, %s52
      %p61 = scmp.eq.s32.totalorder %s20, 0
      %p62 = por %p60, %p61
      %p63 = scmp.ne.s32.totalorder %s51, %s52
      %p64 = scmp.eq.s32.totalorder %s21, 1
      %p65 = por %p63, %p64
      %p67 = scmp.ne.s32.totalorder %s52, %s66
      %p68 = scmp.eq.s32.totalorder %s21, 0
      %p69 = por %p67, %p68
      %s71 = sadd.s32 %s70, 1
      %p74 = scmp.eq.s32.totalorder %s15, 1
      %p75 = scmp.ne.s32.totalorder %s70, %s72
      %p76 = scmp.eq.s32.totalorder %s15, 0
      %p77 = por %p75, %p76
      %p78 = scmp.ne.s32.totalorder %s70, %s72
      %p79 = scmp.eq.s32.totalorder %s20, 1
      %p80 = por %p78, %p79
      %p81 = scmp.ne.s32.totalorder %s72, %s73
      %p82 = scmp.eq.s32.totalorder %s20, 0
      %p83 = por %p81, %p82
      %p84 = scmp.ne.s32.totalorder %s72, %s73
      %p85 = scmp.eq.s32.totalorder %s21, 1
      %p86 = por %p84, %p85
      %p88 = scmp.ne.s32.totalorder %s73, %s87
      %p89 = scmp.eq.s32.totalorder %s21, 0
      %p90 = por %p88, %p89
      %s92 = sadd.s32 %s91, 1
      %p95 = scmp.eq.s32.totalorder %s15, 1
      %p96 = scmp.ne.s32.totalorder %s91, %s93
      %p97 = scmp.eq.s32.totalorder %s15, 0
      %p98 = por %p96, %p97
      %p99 = scmp.ne.s32.totalorder %s91, %s93
      %p100 = scmp.eq.s32.totalorder %s20, 1
      %p101 = por %p99, %p100
      %p102 = scmp.ne.s32.totalorder %s93, %s94
      %p103 = scmp.eq.s32.totalorder %s20, 0
      %p104 = por %p102, %p103
      %p105 = scmp.ne.s32.totalorder %s93, %s94
      %p106 = scmp.eq.s32.totalorder %s21, 1
      %p107 = por %p105, %p106
      %p109 = scmp.ne.s32.totalorder %s94, %s108
      %p110 = scmp.eq.s32.totalorder %s21, 0
      %p111 = por %p109, %p110
      %s113 = sadd.s32 %s112, 1
      %p116 = scmp.eq.s32.totalorder %s15, 1
      %p117 = scmp.ne.s32.totalorder %s112, %s114
      %p118 = scmp.eq.s32.totalorder %s15, 0
      %p119 = por %p117, %p118
      %p120 = scmp.ne.s32.totalorder %s112, %s114
      %p121 = scmp.eq.s32.totalorder %s20, 1
      %p122 = por %p120, %p121
      %p123 = scmp.ne.s32.totalorder %s114, %s115
      %p124 = scmp.eq.s32.totalorder %s20, 0
      %p125 = por %p123, %p124
      %p126 = scmp.ne.s32.totalorder %s114, %s115
      %p127 = scmp.eq.s32.totalorder %s21, 1
      %p128 = por %p126, %p127
      %p130 = scmp.ne.s32.totalorder %s115, %s129
      %p131 = scmp.eq.s32.totalorder %s21, 0
      %p132 = por %p130, %p131
      %s134 = sadd.s32 %s133, 1
      %p137 = scmp.eq.s32.totalorder %s15, 1
      %p138 = scmp.ne.s32.totalorder %s133, %s135
      %p139 = scmp.eq.s32.totalorder %s15, 0
      %p140 = por %p138, %p139
      %p141 = scmp.ne.s32.totalorder %s133, %s135
      %p142 = scmp.eq.s32.totalorder %s20, 1
      %p143 = por %p141, %p142
      %p144 = scmp.ne.s32.totalorder %s135, %s136
      %p145 = scmp.eq.s32.totalorder %s20, 0
      %p146 = por %p144, %p145
      %p147 = scmp.ne.s32.totalorder %s135, %s136
      %p148 = scmp.eq.s32.totalorder %s21, 1
      %p149 = por %p147, %p148
      %p151 = scmp.ne.s32.totalorder %s136, %s150
      %p152 = scmp.eq.s32.totalorder %s21, 0
      %p153 = por %p151, %p152
      %s155 = sadd.s32 %s154, 1
      %p158 = scmp.eq.s32.totalorder %s15, 1
      %p159 = scmp.ne.s32.totalorder %s154, %s156
      %p160 = scmp.eq.s32.totalorder %s15, 0
      %p161 = por %p159, %p160
      %p162 = scmp.ne.s32.totalorder %s154, %s156
      %p163 = scmp.eq.s32.totalorder %s20, 1
      %p164 = por %p162, %p163
      %p165 = scmp.ne.s32.totalorder %s156, %s157
      %p166 = scmp.eq.s32.totalorder %s20, 0
      %p167 = por %p165, %p166
      %p168 = scmp.ne.s32.totalorder %s156, %s157
      %p169 = scmp.eq.s32.totalorder %s21, 1
      %p170 = por %p168, %p169
      %p172 = scmp.ne.s32.totalorder %s157, %s171
      %p173 = scmp.eq.s32.totalorder %s21, 0
      %p174 = por %p172, %p173
      %s175 = ssub.s32 %s15, %s22
      %p176 = scmp.eq.s32.totalorder %s175, 0
      %s178 = sadd.s32 %s177, 1
      %s179 = scalar_select %p176, %s177, %s178
      %p182 = pneg %p176
      %p183 = scmp.eq.s32.totalorder %s15, 1
      %p184 = por %p182, %p183
      %p185 = scmp.ne.s32.totalorder %s177, %s180
      %p186 = scmp.eq.s32.totalorder %s15, 0
      %p187 = por %p185, %p186
      %p188 = scmp.ne.s32.totalorder %s177, %s180
      %p189 = scmp.eq.s32.totalorder %s20, 1
      %p190 = por %p188, %p189
      %p191 = scmp.ne.s32.totalorder %s180, %s181
      %p192 = scmp.eq.s32.totalorder %s20, 0
      %p193 = por %p191, %p192
      %p194 = scmp.ne.s32.totalorder %s180, %s181
      %p195 = scmp.eq.s32.totalorder %s21, 1
      %p196 = por %p194, %p195
      %p198 = scmp.ne.s32.totalorder %s181, %s197
      %p199 = scmp.eq.s32.totalorder %s21, 0
      %p200 = por %p198, %p199
      %p201 = scmp.le.s32.totalorder 1, %s15
      %p202 = scmp.lt.s32.totalorder %s15, 3
      %p203 = pnand %p201, %p202
      %p204 = pneg %p203
      // Predicated region
      $region9: #{general_nn_forward.1} parent=5 // pred_check
        _
      $region10: #{general_nn_forward.1} parent=5 // pred_check_branch
        %206 = sbr.rel (%p203) target = $region12
      $region11: #{general_nn_forward.1} parent=5 // pred_region
        %s207 = ssub.s32 %s15, 1
        // Predicated region
        $region13: #{general_nn_forward.1} parent=11 // pred_check
          %p208 = pneg %p62
        $region14: #{general_nn_forward.1} parent=11 // pred_check_branch
          %210 = sbr.rel (%p208) target = $region16
        $region15: #{general_nn_forward.1} parent=11 // pred_region
          %212 = vsyncadd [#allocation3], 0
          %s213 = sshll.u32 %s1, 4
          %s214 = int_to_ptr.hbm [resolvable:$true] %s213
          %s215 = sshll.u32 [#allocation2], 4
          %s216 = int_to_ptr.vmem [resolvable:$true] %s215
          %221 = dma.hbm_to_vmem [thread:$0]  %s214, 1024, %s216, [#allocation3], 64, 64, 4
        $region16: #{general_nn_forward.1} parent=11 // pred_fallthru
          _
        // Predicated region
        $region17: #{general_nn_forward.1} parent=11 // pred_check
          %p222 = pneg %p83
        $region18: #{general_nn_forward.1} parent=11 // pred_check_branch
          %224 = sbr.rel (%p222) target = $region20
        $region19: #{general_nn_forward.1} parent=11 // pred_region
          _
        $region20: #{general_nn_forward.1} parent=11 // pred_fallthru
          _
        // Predicated region
        $region21: #{general_nn_forward.1} parent=11 // pred_check
          %p225 = pneg %p104
        $region22: #{general_nn_forward.1} parent=11 // pred_check_branch
          %227 = sbr.rel (%p225) target = $region24
        $region23: #{general_nn_forward.1} parent=11 // pred_region
          %229 = vsyncadd [#allocation5], 0
          %s230 = sshll.u32 %s3, 4
          %s231 = int_to_ptr.hbm [resolvable:$true] %s230
          %s232 = sshll.u32 [#allocation4], 4
          %s233 = int_to_ptr.vmem [resolvable:$true] %s232
          %238 = dma.hbm_to_vmem [thread:$0]  %s231, 1024, %s233, [#allocation5], 64, 64, 4
        $region24: #{general_nn_forward.1} parent=11 // pred_fallthru
          _
        // Predicated region
        $region25: #{general_nn_forward.1} parent=11 // pred_check
          %p239 = pneg %p125
        $region26: #{general_nn_forward.1} parent=11 // pred_check_branch
          %241 = sbr.rel (%p239) target = $region28
        $region27: #{general_nn_forward.1} parent=11 // pred_region
          _
        $region28: #{general_nn_forward.1} parent=11 // pred_fallthru
          _
        // Predicated region
        $region29: #{general_nn_forward.1} parent=11 // pred_check
          %p242 = pneg %p146
        $region30: #{general_nn_forward.1} parent=11 // pred_check_branch
          %244 = sbr.rel (%p242) target = $region32
        $region31: #{general_nn_forward.1} parent=11 // pred_region
          %246 = vsyncadd [#allocation5], 0
          %s247 = sshll.u32 %s5, 4
          %s248 = int_to_ptr.hbm [resolvable:$true] %s247
          %s249 = sshll.u32 [#allocation6], 4
          %s250 = int_to_ptr.vmem [resolvable:$true] %s249
          %255 = dma.hbm_to_vmem [thread:$0]  %s248, 1024, %s250, [#allocation5], 64, 64, 4
        $region32: #{general_nn_forward.1} parent=11 // pred_fallthru
          _
        // Predicated region
        $region33: #{general_nn_forward.1} parent=11 // pred_check
          %p256 = pneg %p167
        $region34: #{general_nn_forward.1} parent=11 // pred_check_branch
          %258 = sbr.rel (%p256) target = $region36
        $region35: #{general_nn_forward.1} parent=11 // pred_region
          _
        $region36: #{general_nn_forward.1} parent=11 // pred_fallthru
          _
      $region12: #{general_nn_forward.1} parent=5 // pred_fallthru
        _
      %p259 = scmp.lt.s32.totalorder %s15, 2
      // Predicated region
      $region37: #{general_nn_forward.1} parent=5 // pred_check
        %p260 = pneg %p259
      $region38: #{general_nn_forward.1} parent=5 // pred_check_branch
        %262 = sbr.rel (%p260) target = $region40
      $region39: #{general_nn_forward.1} parent=5 // pred_region
        // Predicated region
        $region41: #{general_nn_forward.1} parent=39 // pred_check
          %p263 = pneg %p35
        $region42: #{general_nn_forward.1} parent=39 // pred_check_branch
          %265 = sbr.rel (%p263) target = $region44
        $region43: #{general_nn_forward.1} parent=39 // pred_region
          %p266 = scmp.lt.s32.totalorder %s15, 1
          %s267 = scalar_select %p266, %s15, 1
          %s268 = smul.addr %s267, 4
          %s269 = scalar_lea.vmem %s0, %s268
        $region44: #{general_nn_forward.1} parent=39 // pred_fallthru
          _
      $region40: #{general_nn_forward.1} parent=5 // pred_fallthru
        _
      %p270 = scmp.le.s32.totalorder 1, %s15
      %p271 = scmp.lt.s32.totalorder %s15, 3
      %p272 = pnand %p270, %p271
      %p273 = pneg %p272
      // Predicated region
      $region45: #{general_nn_forward.1} parent=5 // pred_check
        _
      $region46: #{general_nn_forward.1} parent=5 // pred_check_branch
        %275 = sbr.rel (%p272) target = $region48
      $region47: #{general_nn_forward.1} parent=5 // pred_region
        %s276 = ssub.s32 %s15, 1
        // Predicated region
        $region49: #{general_nn_forward.1} parent=47 // pred_check
          %p277 = pneg %p62
        $region50: #{general_nn_forward.1} parent=47 // pred_check_branch
          %279 = sbr.rel (%p277) target = $region52
        $region51: #{general_nn_forward.1} parent=47 // pred_region
          %281 = dma.done [#allocation3], 1024
        $region52: #{general_nn_forward.1} parent=47 // pred_fallthru
          _
        // Predicated region
        $region53: #{general_nn_forward.1} parent=47 // pred_check
          %p282 = pneg %p104
        $region54: #{general_nn_forward.1} parent=47 // pred_check_branch
          %284 = sbr.rel (%p282) target = $region56
        $region55: #{general_nn_forward.1} parent=47 // pred_region
          %286 = dma.done [#allocation5], 1024
        $region56: #{general_nn_forward.1} parent=47 // pred_fallthru
          _
        // Predicated region
        $region57: #{general_nn_forward.1} parent=47 // pred_check
          %p287 = pneg %p146
        $region58: #{general_nn_forward.1} parent=47 // pred_check_branch
          %289 = sbr.rel (%p287) target = $region60
        $region59: #{general_nn_forward.1} parent=47 // pred_region
          %291 = dma.done [#allocation5], 1024
        $region60: #{general_nn_forward.1} parent=47 // pred_fallthru
          _
        %p292 = scmp.lt.s32.totalorder %s20, 1
        %s293 = scalar_select %p292, %s20, 1
        %s294 = smul.addr %s293, 4
        %s295 = scalar_lea.vmem %s0, %s294
        %p296 = pneg %p41
        %p297 = pneg %p38
        %p298 = pneg %p62
        %p299 = pneg %p59
        %p300 = pneg %p83
        %p301 = pneg %p80
        %p302 = pneg %p104
        %p303 = pneg %p101
        %p304 = pneg %p125
        %p305 = pneg %p122
        %p306 = pneg %p146
        %p307 = pneg %p143
        %p308 = pneg %p167
        %p309 = pneg %p164
        %p310 = pneg %p193
        %p311 = pneg %p190
        %p312 = scmp.lt.s32.totalorder %s20, 1
        %s313 = scalar_select %p312, %s20, 1
        %s314 = smul.addr %s313, 8
        %s315 = scalar_lea.vmem %s7, %s314
        %p316 = scmp.lt.s32.totalorder %s20, 1
        %s317 = scalar_select %p316, %s20, 1
        %s318 = smul.addr %s317, 4
        %s319 = scalar_lea.vmem %s0, %s318
        %p320 = scmp.lt.s32.totalorder %s20, 1
        %s321 = scalar_select %p320, %s20, 1
        %s322 = smul.addr %s321, 8
        %s323 = scalar_lea.vmem %s7, %s322
        %v324 = vld [vmem:[%s319] sm:$0xf]
        %v325 = vld [vmem:[#allocation2] sm:$0xf]
        %v326 = vld [vmem:[#allocation2 + $0x4] sm:$0xf]
        %v327 = vld [vmem:[#allocation2 + $0x8] sm:$0xf]
        %v328 = vld [vmem:[#allocation2 + $0xc] sm:$0xf]
        %v329 = vld [vmem:[#allocation2 + $0x10] sm:$0xf]
        %v330 = vld [vmem:[#allocation2 + $0x14] sm:$0xf]
        %v331 = vld [vmem:[#allocation2 + $0x18] sm:$0xf]
        %v332 = vld [vmem:[#allocation2 + $0x1c] sm:$0xf]
        %v333 = vld [vmem:[#allocation2 + $0x20] sm:$0xf]
        %v334 = vld [vmem:[#allocation2 + $0x24] sm:$0xf]
        %v335 = vld [vmem:[#allocation2 + $0x28] sm:$0xf]
        %v336 = vld [vmem:[#allocation2 + $0x2c] sm:$0xf]
        %v337 = vld [vmem:[#allocation2 + $0x30] sm:$0xf]
        %v338 = vld [vmem:[#allocation2 + $0x34] sm:$0xf]
        %v339 = vld [vmem:[#allocation2 + $0x38] sm:$0xf]
        %v340 = vld [vmem:[#allocation2 + $0x3c] sm:$0xf]
        %v341 = vld [vmem:[%s2] sm:$0x1]
        %v343 = vperm.slane %v341, 0
        %v361 = vunpack.c.l.b16 %v325
        %v362 = vunpack.c.l.b16 %v326
        %v363 = vunpack.c.l.b16 %v327
        %v364 = vunpack.c.l.b16 %v328
        %v365 = vunpack.c.l.b16 %v329
        %v366 = vunpack.c.l.b16 %v330
        %v367 = vunpack.c.l.b16 %v331
        %v368 = vunpack.c.l.b16 %v332
        %v369 = vunpack.c.l.b16 %v333
        %v370 = vunpack.c.l.b16 %v334
        %v371 = vunpack.c.l.b16 %v335
        %v372 = vunpack.c.l.b16 %v336
        %v373 = vunpack.c.l.b16 %v337
        %v374 = vunpack.c.l.b16 %v338
        %v375 = vunpack.c.l.b16 %v339
        %v376 = vunpack.c.l.b16 %v340
        %v377 = vpack.c.b16 %v362, %v361
        %v378 = vpack.c.b16 %v364, %v363
        %v379 = vpack.c.b16 %v366, %v365
        %v380 = vpack.c.b16 %v368, %v367
        %v381 = vpack.c.b16 %v370, %v369
        %v382 = vpack.c.b16 %v372, %v371
        %v383 = vpack.c.b16 %v374, %v373
        %v384 = vpack.c.b16 %v376, %v375
        %393 = vmatpush.bf16.msra.mxu0 %v384
        %394 = vmatpush.bf16.msra.mxu0 %v383
        %395 = vmatpush.bf16.msra.mxu0 %v382
        %396 = vmatpush.bf16.msra.mxu0 %v381
        %397 = vmatpush.bf16.msra.mxu0 %v380
        %398 = vmatpush.bf16.msra.mxu0 %v379
        %399 = vmatpush.bf16.msra.mxu0 %v378
        %400 = vmatpush.bf16.msra.mxu0 %v377
        %401 = vmatmul.bf16.gmra.mxu0 %v324
        %v402 = vpop.f32.mrf.mxu0
        %v403 = vadd.f32 %v343, %v402
        %v404 = vpop.f32.mrf.mxu0
        %405 = vdwg.mxu0
        %v406 = vmax.f32 %v403, 0.0
        %v407 = vpack.c.bf16 %v406, %v406
        %v408 = vld [vmem:[#allocation4] sm:$0xf]
        %v409 = vld [vmem:[#allocation4 + $0x4] sm:$0xf]
        %v410 = vld [vmem:[#allocation4 + $0x8] sm:$0xf]
        %v411 = vld [vmem:[#allocation4 + $0xc] sm:$0xf]
        %v412 = vld [vmem:[#allocation4 + $0x10] sm:$0xf]
        %v413 = vld [vmem:[#allocation4 + $0x14] sm:$0xf]
        %v414 = vld [vmem:[#allocation4 + $0x18] sm:$0xf]
        %v415 = vld [vmem:[#allocation4 + $0x1c] sm:$0xf]
        %v416 = vld [vmem:[#allocation4 + $0x20] sm:$0xf]
        %v417 = vld [vmem:[#allocation4 + $0x24] sm:$0xf]
        %v418 = vld [vmem:[#allocation4 + $0x28] sm:$0xf]
        %v419 = vld [vmem:[#allocation4 + $0x2c] sm:$0xf]
        %v420 = vld [vmem:[#allocation4 + $0x30] sm:$0xf]
        %v421 = vld [vmem:[#allocation4 + $0x34] sm:$0xf]
        %v422 = vld [vmem:[#allocation4 + $0x38] sm:$0xf]
        %v423 = vld [vmem:[#allocation4 + $0x3c] sm:$0xf]
        %v424 = vld [vmem:[%s4] sm:$0x1]
        %v426 = vperm.slane %v424, 0
        %v444 = vunpack.c.l.b16 %v408
        %v445 = vunpack.c.l.b16 %v409
        %v446 = vunpack.c.l.b16 %v410
        %v447 = vunpack.c.l.b16 %v411
        %v448 = vunpack.c.l.b16 %v412
        %v449 = vunpack.c.l.b16 %v413
        %v450 = vunpack.c.l.b16 %v414
        %v451 = vunpack.c.l.b16 %v415
        %v452 = vunpack.c.l.b16 %v416
        %v453 = vunpack.c.l.b16 %v417
        %v454 = vunpack.c.l.b16 %v418
        %v455 = vunpack.c.l.b16 %v419
        %v456 = vunpack.c.l.b16 %v420
        %v457 = vunpack.c.l.b16 %v421
        %v458 = vunpack.c.l.b16 %v422
        %v459 = vunpack.c.l.b16 %v423
        %v460 = vpack.c.b16 %v445, %v444
        %v461 = vpack.c.b16 %v447, %v446
        %v462 = vpack.c.b16 %v449, %v448
        %v463 = vpack.c.b16 %v451, %v450
        %v464 = vpack.c.b16 %v453, %v452
        %v465 = vpack.c.b16 %v455, %v454
        %v466 = vpack.c.b16 %v457, %v456
        %v467 = vpack.c.b16 %v459, %v458
        %476 = vmatpush.bf16.msra.mxu0 %v467
        %477 = vmatpush.bf16.msra.mxu0 %v466
        %478 = vmatpush.bf16.msra.mxu0 %v465
        %479 = vmatpush.bf16.msra.mxu0 %v464
        %480 = vmatpush.bf16.msra.mxu0 %v463
        %481 = vmatpush.bf16.msra.mxu0 %v462
        %482 = vmatpush.bf16.msra.mxu0 %v461
        %483 = vmatpush.bf16.msra.mxu0 %v460
        %484 = vmatmul.bf16.gmra.mxu0 %v407
        %v485 = vpop.f32.mrf.mxu0
        %v486 = vadd.f32 %v426, %v485
        %v487 = vpop.f32.mrf.mxu0
        %488 = vdwg.mxu0
        %v489 = vmax.f32 %v486, 0.0
        %v490 = vpack.c.bf16 %v489, %v489
        %v491 = vld [vmem:[#allocation6] sm:$0xf]
        %v492 = vld [vmem:[#allocation6 + $0x4] sm:$0xf]
        %v493 = vld [vmem:[#allocation6 + $0x8] sm:$0xf]
        %v494 = vld [vmem:[#allocation6 + $0xc] sm:$0xf]
        %v495 = vld [vmem:[#allocation6 + $0x10] sm:$0xf]
        %v496 = vld [vmem:[#allocation6 + $0x14] sm:$0xf]
        %v497 = vld [vmem:[#allocation6 + $0x18] sm:$0xf]
        %v498 = vld [vmem:[#allocation6 + $0x1c] sm:$0xf]
        %v499 = vld [vmem:[#allocation6 + $0x20] sm:$0xf]
        %v500 = vld [vmem:[#allocation6 + $0x24] sm:$0xf]
        %v501 = vld [vmem:[#allocation6 + $0x28] sm:$0xf]
        %v502 = vld [vmem:[#allocation6 + $0x2c] sm:$0xf]
        %v503 = vld [vmem:[#allocation6 + $0x30] sm:$0xf]
        %v504 = vld [vmem:[#allocation6 + $0x34] sm:$0xf]
        %v505 = vld [vmem:[#allocation6 + $0x38] sm:$0xf]
        %v506 = vld [vmem:[#allocation6 + $0x3c] sm:$0xf]
        %v507 = vld [vmem:[%s6] sm:$0x1]
        %v509 = vperm.slane %v507, 0
        %v527 = vunpack.c.l.b16 %v491
        %v528 = vunpack.c.l.b16 %v492
        %v529 = vunpack.c.l.b16 %v493
        %v530 = vunpack.c.l.b16 %v494
        %v531 = vunpack.c.l.b16 %v495
        %v532 = vunpack.c.l.b16 %v496
        %v533 = vunpack.c.l.b16 %v497
        %v534 = vunpack.c.l.b16 %v498
        %v535 = vunpack.c.l.b16 %v499
        %v536 = vunpack.c.l.b16 %v500
        %v537 = vunpack.c.l.b16 %v501
        %v538 = vunpack.c.l.b16 %v502
        %v539 = vunpack.c.l.b16 %v503
        %v540 = vunpack.c.l.b16 %v504
        %v541 = vunpack.c.l.b16 %v505
        %v542 = vunpack.c.l.b16 %v506
        %v543 = vpack.c.b16 %v528, %v527
        %v544 = vpack.c.b16 %v530, %v529
        %v545 = vpack.c.b16 %v532, %v531
        %v546 = vpack.c.b16 %v534, %v533
        %v547 = vpack.c.b16 %v536, %v535
        %v548 = vpack.c.b16 %v538, %v537
        %v549 = vpack.c.b16 %v540, %v539
        %v550 = vpack.c.b16 %v542, %v541
        %559 = vmatpush.bf16.msra.mxu0 %v550
        %560 = vmatpush.bf16.msra.mxu0 %v549
        %561 = vmatpush.bf16.msra.mxu0 %v548
        %562 = vmatpush.bf16.msra.mxu0 %v547
        %563 = vmatpush.bf16.msra.mxu0 %v546
        %564 = vmatpush.bf16.msra.mxu0 %v545
        %565 = vmatpush.bf16.msra.mxu0 %v544
        %566 = vmatpush.bf16.msra.mxu0 %v543
        %567 = vmatmul.bf16.gmra.mxu0 %v490
        %v568 = vpop.f32.mrf.mxu0
        %v569 = vadd.f32 %v509, %v568
        %v570 = vpop.f32.mrf.mxu0
        %571 = vdwg.mxu0
        %572 = vst [vmem:[%s323] sm:$0xff] %v569
        %p573 = scmp.lt.s32.totalorder %s20, 1
        %s574 = scalar_select %p573, %s20, 1
        %s575 = smul.addr %s574, 8
        %s576 = scalar_lea.vmem %s7, %s575
        // Predicated region
        $region61: #{general_nn_forward.1} parent=47 // pred_check
          %p577 = pneg %p190
        $region62: #{general_nn_forward.1} parent=47 // pred_check_branch
          %579 = sbr.rel (%p577) target = $region64
        $region63: #{general_nn_forward.1} parent=47 // pred_region
          _
        $region64: #{general_nn_forward.1} parent=47 // pred_fallthru
          _
      $region48: #{general_nn_forward.1} parent=5 // pred_fallthru
        _
      %p580 = scmp.le.s32.totalorder 2, %s15
      // Predicated region
      $region65: #{general_nn_forward.1} parent=5 // pred_check
        %p581 = pneg %p580
      $region66: #{general_nn_forward.1} parent=5 // pred_check_branch
        %583 = sbr.rel (%p581) target = $region68
      $region67: #{general_nn_forward.1} parent=5 // pred_region
        %s584 = ssub.s32 %s15, 2
        // Predicated region
        $region69: #{general_nn_forward.1} parent=67 // pred_check
          %p585 = pneg %p196
        $region70: #{general_nn_forward.1} parent=67 // pred_check_branch
          %587 = sbr.rel (%p585) target = $region72
        $region71: #{general_nn_forward.1} parent=67 // pred_region
          %p588 = scmp.lt.s32.totalorder %s21, 1
          %s589 = scalar_select %p588, %s21, 1
          %s590 = smul.addr %s589, 8
          %s591 = scalar_lea.vmem %s7, %s590
        $region72: #{general_nn_forward.1} parent=67 // pred_fallthru
          _
      $region68: #{general_nn_forward.1} parent=5 // pred_fallthru
        _
    $region6: #{general_nn_forward.1} parent=1 // loop_footer
      %s19 = sadd.s32 1, %s15
    $region7: #{general_nn_forward.1} parent=1 // loop_footer_branch
      %14 = sbr.rel target = $region3
    $region8: #{general_nn_forward.1} parent=1 // loop_exit
      _
    %592 = vsyncpa [#allocation3], 1
    %s593 = scalar_lea.sflag [#allocation3], 1
    %594 = vsyncpa %s593, 1
    %595 = vsyncpa [#allocation5], 1

// kernel: general_nn_forward.1
$region0: #{general_nn_forward.1}
  #allocation0 [shape = 'u32[]', space=smem, size = 0x4, offset = 0x4, fixed_abs, tag = 'smem constant byte address 0x4 - core index']
  #allocation1 [shape = 'u32[72,128]{1,0:T(1,128)}', space=vmem, size = 0x9000, scoped, tag = 'internal scratch']
  %s0 = inlined_call_operand.vmem [shape: bf16[16,128], index: 0, kind: input, shape index: {}]
  %s1 = inlined_call_operand.hbm [shape: bf16[128,128], index: 1, kind: input, shape index: {}]
  %s2 = inlined_call_operand.vmem [shape: f32[1,128], index: 2, kind: input, shape index: {}]
  %s3 = inlined_call_operand.hbm [shape: bf16[128,128], index: 3, kind: input, shape index: {}]
  %s4 = inlined_call_operand.vmem [shape: f32[1,128], index: 4, kind: input, shape index: {}]
  %s5 = inlined_call_operand.hbm [shape: bf16[128,128], index: 5, kind: input, shape index: {}]
  %s6 = inlined_call_operand.vmem [shape: f32[1,128], index: 6, kind: input, shape index: {}]
  %s7 = inlined_call_operand.vmem [shape: f32[16,128], index: 7, kind: output, shape index: {}]
  %s8 = sld [smem:[#allocation0]]
  $region73: #{general_nn_forward.1} parent=0
    _
  %s10 = ssub.s32 1, %s8
  %s11 = scalar_select 0, %s10, %s8
  $region1: #{general_nn_forward.1} parent=0
    #allocation2 [shape = 'u8[32768]{0}', space=vmem, size = 0x8000, scoped, tag = 'input window, operand 1, single buffered']
    #allocation3 [shape = 's32[2]{0}', space=sflag, size = 0x8, scoped, tag = 'scoped memory for general_nn_forward.1']
    #allocation4 [shape = 'u8[32768]{0}', space=vmem, size = 0x8000, scoped, tag = 'input window, operand 3, single buffered']
    #allocation5 [shape = 's32[1]{0}', space=sflag, size = 0x4, scoped, tag = 'scoped memory for general_nn_forward.1']
    #allocation6 [shape = 'u8[32768]{0}', space=vmem, size = 0x8000, scoped, tag = 'input window, operand 5, single buffered']
    %12 = vsyncpa [#allocation3], 0
    %13 = vsyncpa [#allocation5], 0
    loop: start=0, step=1, limit=4
    $region2: #{general_nn_forward.1} parent=1 // loop_pre_header
      _
    $region3: #{general_nn_forward.1} parent=1 // loop_header
      %s15 = sphi 0, %s19
      %p16 = scmp.ge.s32.totalorder %s15, 4
      %s25 = sphi 0, %s27
      %s28 = sphi 0, %s25
      %s29 = sphi 0, %s28
      %s45 = sphi 0, %s29
      %s49 = sphi 0, %s49
      %s51 = sphi 0, %s49
      %s52 = sphi 0, %s51
      %s66 = sphi 0, %s52
      %s70 = sphi 0, %s70
      %s72 = sphi 0, %s70
      %s73 = sphi 0, %s72
      %s87 = sphi 0, %s73
      %s91 = sphi 0, %s91
      %s93 = sphi 0, %s91
      %s94 = sphi 0, %s93
      %s108 = sphi 0, %s94
      %s112 = sphi 0, %s112
      %s114 = sphi 0, %s112
      %s115 = sphi 0, %s114
      %s129 = sphi 0, %s115
      %s133 = sphi 0, %s133
      %s135 = sphi 0, %s133
      %s136 = sphi 0, %s135
      %s150 = sphi 0, %s136
      %s154 = sphi 0, %s154
      %s156 = sphi 0, %s154
      %s157 = sphi 0, %s156
      %s171 = sphi 0, %s157
      %s177 = sphi 0, %s179
      %s180 = sphi 0, %s177
      %s181 = sphi 0, %s180
      %s197 = sphi 0, %s181
    $region4: #{general_nn_forward.1} parent=1 // loop_header_branch
      %18 = sbr.rel (%p16) target = $region8
    $region5: #{general_nn_forward.1} parent=1 // loop_body
      %s20 = ssub.s32 %s15, 1
      %s21 = ssub.s32 %s15, 2
      %s22 = sadd.s32 %s15, 1
      %s23 = ssub.s32 %s15, %s22
      %p24 = scmp.eq.s32.totalorder %s23, 0
      %s26 = sadd.s32 %s25, 1
      %s27 = scalar_select %p24, %s25, %s26
      %p30 = pneg %p24
      %p31 = scmp.eq.s32.totalorder %s15, 1
      %p32 = por %p30, %p31
      %p33 = scmp.ne.s32.totalorder %s25, %s28
      %p34 = scmp.eq.s32.totalorder %s15, 0
      %p35 = por %p33, %p34
      %p36 = scmp.ne.s32.totalorder %s25, %s28
      %p37 = scmp.eq.s32.totalorder %s20, 1
      %p38 = por %p36, %p37
      %p39 = scmp.ne.s32.totalorder %s28, %s29
      %p40 = scmp.eq.s32.totalorder %s20, 0
      %p41 = por %p39, %p40
      %p42 = scmp.ne.s32.totalorder %s28, %s29
      %p43 = scmp.eq.s32.totalorder %s21, 1
      %p44 = por %p42, %p43
      %p46 = scmp.ne.s32.totalorder %s29, %s45
      %p47 = scmp.eq.s32.totalorder %s21, 0
      %p48 = por %p46, %p47
      %s50 = sadd.s32 %s49, 1
      %p53 = scmp.eq.s32.totalorder %s15, 1
      %p54 = scmp.ne.s32.totalorder %s49, %s51
      %p55 = scmp.eq.s32.totalorder %s15, 0
      %p56 = por %p54, %p55
      %p57 = scmp.ne.s32.totalorder %s49, %s51
      %p58 = scmp.eq.s32.totalorder %s20, 1
      %p59 = por %p57, %p58
      %p60 = scmp.ne.s32.totalorder %s51, %s52
      %p61 = scmp.eq.s32.totalorder %s20, 0
      %p62 = por %p60, %p61
      %p63 = scmp.ne.s32.totalorder %s51, %s52
      %p64 = scmp.eq.s32.totalorder %s21, 1
      %p65 = por %p63, %p64
      %p67 = scmp.ne.s32.totalorder %s52, %s66
      %p68 = scmp.eq.s32.totalorder %s21, 0
      %p69 = por %p67, %p68
      %s71 = sadd.s32 %s70, 1
      %p74 = scmp.eq.s32.totalorder %s15, 1
      %p75 = scmp.ne.s32.totalorder %s70, %s72
      %p76 = scmp.eq.s32.totalorder %s15, 0
      %p77 = por %p75, %p76
      %p78 = scmp.ne.s32.totalorder %s70, %s72
      %p79 = scmp.eq.s32.totalorder %s20, 1
      %p80 = por %p78, %p79
      %p81 = scmp.ne.s32.totalorder %s72, %s73
      %p82 = scmp.eq.s32.totalorder %s20, 0
      %p83 = por %p81, %p82
      %p84 = scmp.ne.s32.totalorder %s72, %s73
      %p85 = scmp.eq.s32.totalorder %s21, 1
      %p86 = por %p84, %p85
      %p88 = scmp.ne.s32.totalorder %s73, %s87
      %p89 = scmp.eq.s32.totalorder %s21, 0
      %p90 = por %p88, %p89
      %s92 = sadd.s32 %s91, 1
      %p95 = scmp.eq.s32.totalorder %s15, 1
      %p96 = scmp.ne.s32.totalorder %s91, %s93
      %p97 = scmp.eq.s32.totalorder %s15, 0
      %p98 = por %p96, %p97
      %p99 = scmp.ne.s32.totalorder %s91, %s93
      %p100 = scmp.eq.s32.totalorder %s20, 1
      %p101 = por %p99, %p100
      %p102 = scmp.ne.s32.totalorder %s93, %s94
      %p103 = scmp.eq.s32.totalorder %s20, 0
      %p104 = por %p102, %p103
      %p105 = scmp.ne.s32.totalorder %s93, %s94
      %p106 = scmp.eq.s32.totalorder %s21, 1
      %p107 = por %p105, %p106
      %p109 = scmp.ne.s32.totalorder %s94, %s108
      %p110 = scmp.eq.s32.totalorder %s21, 0
      %p111 = por %p109, %p110
      %s113 = sadd.s32 %s112, 1
      %p116 = scmp.eq.s32.totalorder %s15, 1
      %p117 = scmp.ne.s32.totalorder %s112, %s114
      %p118 = scmp.eq.s32.totalorder %s15, 0
      %p119 = por %p117, %p118
      %p120 = scmp.ne.s32.totalorder %s112, %s114
      %p121 = scmp.eq.s32.totalorder %s20, 1
      %p122 = por %p120, %p121
      %p123 = scmp.ne.s32.totalorder %s114, %s115
      %p124 = scmp.eq.s32.totalorder %s20, 0
      %p125 = por %p123, %p124
      %p126 = scmp.ne.s32.totalorder %s114, %s115
      %p127 = scmp.eq.s32.totalorder %s21, 1
      %p128 = por %p126, %p127
      %p130 = scmp.ne.s32.totalorder %s115, %s129
      %p131 = scmp.eq.s32.totalorder %s21, 0
      %p132 = por %p130, %p131
      %s134 = sadd.s32 %s133, 1
      %p137 = scmp.eq.s32.totalorder %s15, 1
      %p138 = scmp.ne.s32.totalorder %s133, %s135
      %p139 = scmp.eq.s32.totalorder %s15, 0
      %p140 = por %p138, %p139
      %p141 = scmp.ne.s32.totalorder %s133, %s135
      %p142 = scmp.eq.s32.totalorder %s20, 1
      %p143 = por %p141, %p142
      %p144 = scmp.ne.s32.totalorder %s135, %s136
      %p145 = scmp.eq.s32.totalorder %s20, 0
      %p146 = por %p144, %p145
      %p147 = scmp.ne.s32.totalorder %s135, %s136
      %p148 = scmp.eq.s32.totalorder %s21, 1
      %p149 = por %p147, %p148
      %p151 = scmp.ne.s32.totalorder %s136, %s150
      %p152 = scmp.eq.s32.totalorder %s21, 0
      %p153 = por %p151, %p152
      %s155 = sadd.s32 %s154, 1
      %p158 = scmp.eq.s32.totalorder %s15, 1
      %p159 = scmp.ne.s32.totalorder %s154, %s156
      %p160 = scmp.eq.s32.totalorder %s15, 0
      %p161 = por %p159, %p160
      %p162 = scmp.ne.s32.totalorder %s154, %s156
      %p163 = scmp.eq.s32.totalorder %s20, 1
      %p164 = por %p162, %p163
      %p165 = scmp.ne.s32.totalorder %s156, %s157
      %p166 = scmp.eq.s32.totalorder %s20, 0
      %p167 = por %p165, %p166
      %p168 = scmp.ne.s32.totalorder %s156, %s157
      %p169 = scmp.eq.s32.totalorder %s21, 1
      %p170 = por %p168, %p169
      %p172 = scmp.ne.s32.totalorder %s157, %s171
      %p173 = scmp.eq.s32.totalorder %s21, 0
      %p174 = por %p172, %p173
      %s175 = ssub.s32 %s15, %s22
      %p176 = scmp.eq.s32.totalorder %s175, 0
      %s178 = sadd.s32 %s177, 1
      %s179 = scalar_select %p176, %s177, %s178
      %p182 = pneg %p176
      %p183 = scmp.eq.s32.totalorder %s15, 1
      %p184 = por %p182, %p183
      %p185 = scmp.ne.s32.totalorder %s177, %s180
      %p186 = scmp.eq.s32.totalorder %s15, 0
      %p187 = por %p185, %p186
      %p188 = scmp.ne.s32.totalorder %s177, %s180
      %p189 = scmp.eq.s32.totalorder %s20, 1
      %p190 = por %p188, %p189
      %p191 = scmp.ne.s32.totalorder %s180, %s181
      %p192 = scmp.eq.s32.totalorder %s20, 0
      %p193 = por %p191, %p192
      %p194 = scmp.ne.s32.totalorder %s180, %s181
      %p195 = scmp.eq.s32.totalorder %s21, 1
      %p196 = por %p194, %p195
      %p198 = scmp.ne.s32.totalorder %s181, %s197
      %p199 = scmp.eq.s32.totalorder %s21, 0
      %p200 = por %p198, %p199
      %p201 = scmp.le.s32.totalorder 1, %s15
      %p202 = scmp.lt.s32.totalorder %s15, 3
      %p203 = pnand %p201, %p202
      %p204 = pneg %p203
      // Predicated region
      $region9: #{general_nn_forward.1} parent=5 // pred_check
        _
      $region10: #{general_nn_forward.1} parent=5 // pred_check_branch
        %206 = sbr.rel (%p203) target = $region12
      $region11: #{general_nn_forward.1} parent=5 // pred_region
        %s207 = ssub.s32 %s15, 1
        // Predicated region
        $region13: #{general_nn_forward.1} parent=11 // pred_check
          %p208 = pneg %p62
        $region14: #{general_nn_forward.1} parent=11 // pred_check_branch
          %210 = sbr.rel (%p208) target = $region16
        $region15: #{general_nn_forward.1} parent=11 // pred_region
          %212 = vsyncadd [#allocation3], 0
          %s213 = sshll.u32 %s1, 4
          %s214 = int_to_ptr.hbm [resolvable:$true] %s213
          %s215 = sshll.u32 [#allocation2], 4
          %s216 = int_to_ptr.vmem [resolvable:$true] %s215
          %221 = dma.hbm_to_vmem [thread:$0]  %s214, 1024, %s216, [#allocation3], 64, 64, 4
        $region16: #{general_nn_forward.1} parent=11 // pred_fallthru
          _
        // Predicated region
        $region17: #{general_nn_forward.1} parent=11 // pred_check
          %p222 = pneg %p83
        $region18: #{general_nn_forward.1} parent=11 // pred_check_branch
          %224 = sbr.rel (%p222) target = $region20
        $region19: #{general_nn_forward.1} parent=11 // pred_region
          _
        $region20: #{general_nn_forward.1} parent=11 // pred_fallthru
          _
        // Predicated region
        $region21: #{general_nn_forward.1} parent=11 // pred_check
          %p225 = pneg %p104
        $region22: #{general_nn_forward.1} parent=11 // pred_check_branch
          %227 = sbr.rel (%p225) target = $region24
        $region23: #{general_nn_forward.1} parent=11 // pred_region
          %229 = vsyncadd [#allocation5], 0
          %s230 = sshll.u32 %s3, 4
          %s231 = int_to_ptr.hbm [resolvable:$true] %s230
          %s232 = sshll.u32 [#allocation4], 4
          %s233 = int_to_ptr.vmem [resolvable:$true] %s232
          %238 = dma.hbm_to_vmem [thread:$0]  %s231, 1024, %s233, [#allocation5], 64, 64, 4
        $region24: #{general_nn_forward.1} parent=11 // pred_fallthru
          _
        // Predicated region
        $region25: #{general_nn_forward.1} parent=11 // pred_check
          %p239 = pneg %p125
        $region26: #{general_nn_forward.1} parent=11 // pred_check_branch
          %241 = sbr.rel (%p239) target = $region28
        $region27: #{general_nn_forward.1} parent=11 // pred_region
          _
        $region28: #{general_nn_forward.1} parent=11 // pred_fallthru
          _
        // Predicated region
        $region29: #{general_nn_forward.1} parent=11 // pred_check
          %p242 = pneg %p146
        $region30: #{general_nn_forward.1} parent=11 // pred_check_branch
          %244 = sbr.rel (%p242) target = $region32
        $region31: #{general_nn_forward.1} parent=11 // pred_region
          %246 = vsyncadd [#allocation5], 0
          %s247 = sshll.u32 %s5, 4
          %s248 = int_to_ptr.hbm [resolvable:$true] %s247
          %s249 = sshll.u32 [#allocation6], 4
          %s250 = int_to_ptr.vmem [resolvable:$true] %s249
          %255 = dma.hbm_to_vmem [thread:$0]  %s248, 1024, %s250, [#allocation5], 64, 64, 4
        $region32: #{general_nn_forward.1} parent=11 // pred_fallthru
          _
        // Predicated region
        $region33: #{general_nn_forward.1} parent=11 // pred_check
          %p256 = pneg %p167
        $region34: #{general_nn_forward.1} parent=11 // pred_check_branch
          %258 = sbr.rel (%p256) target = $region36
        $region35: #{general_nn_forward.1} parent=11 // pred_region
          _
        $region36: #{general_nn_forward.1} parent=11 // pred_fallthru
          _
      $region12: #{general_nn_forward.1} parent=5 // pred_fallthru
        _
      %p259 = scmp.lt.s32.totalorder %s15, 2
      // Predicated region
      $region37: #{general_nn_forward.1} parent=5 // pred_check
        %p260 = pneg %p259
      $region38: #{general_nn_forward.1} parent=5 // pred_check_branch
        %262 = sbr.rel (%p260) target = $region40
      $region39: #{general_nn_forward.1} parent=5 // pred_region
        // Predicated region
        $region41: #{general_nn_forward.1} parent=39 // pred_check
          %p263 = pneg %p35
        $region42: #{general_nn_forward.1} parent=39 // pred_check_branch
          %265 = sbr.rel (%p263) target = $region44
        $region43: #{general_nn_forward.1} parent=39 // pred_region
          %p266 = scmp.lt.s32.totalorder %s15, 1
          %s267 = scalar_select %p266, %s15, 1
          %s268 = smul.addr %s267, 4
          %s269 = scalar_lea.vmem %s0, %s268
        $region44: #{general_nn_forward.1} parent=39 // pred_fallthru
          _
      $region40: #{general_nn_forward.1} parent=5 // pred_fallthru
        _
      %p270 = scmp.le.s32.totalorder 1, %s15
      %p271 = scmp.lt.s32.totalorder %s15, 3
      %p272 = pnand %p270, %p271
      %p273 = pneg %p272
      // Predicated region
      $region45: #{general_nn_forward.1} parent=5 // pred_check
        _
      $region46: #{general_nn_forward.1} parent=5 // pred_check_branch
        %275 = sbr.rel (%p272) target = $region48
      $region47: #{general_nn_forward.1} parent=5 // pred_region
        %s276 = ssub.s32 %s15, 1
        // Predicated region
        $region49: #{general_nn_forward.1} parent=47 // pred_check
          %p277 = pneg %p62
        $region50: #{general_nn_forward.1} parent=47 // pred_check_branch
          %279 = sbr.rel (%p277) target = $region52
        $region51: #{general_nn_forward.1} parent=47 // pred_region
          %281 = dma.done [#allocation3], 1024
        $region52: #{general_nn_forward.1} parent=47 // pred_fallthru
          _
        // Predicated region
        $region53: #{general_nn_forward.1} parent=47 // pred_check
          %p282 = pneg %p104
        $region54: #{general_nn_forward.1} parent=47 // pred_check_branch
          %284 = sbr.rel (%p282) target = $region56
        $region55: #{general_nn_forward.1} parent=47 // pred_region
          %286 = dma.done [#allocation5], 1024
        $region56: #{general_nn_forward.1} parent=47 // pred_fallthru
          _
        // Predicated region
        $region57: #{general_nn_forward.1} parent=47 // pred_check
          %p287 = pneg %p146
        $region58: #{general_nn_forward.1} parent=47 // pred_check_branch
          %289 = sbr.rel (%p287) target = $region60
        $region59: #{general_nn_forward.1} parent=47 // pred_region
          %291 = dma.done [#allocation5], 1024
        $region60: #{general_nn_forward.1} parent=47 // pred_fallthru
          _
        %p292 = scmp.lt.s32.totalorder %s20, 1
        %s293 = scalar_select %p292, %s20, 1
        %s294 = smul.addr %s293, 4
        %s295 = scalar_lea.vmem %s0, %s294
        %p296 = pneg %p41
        %p297 = pneg %p38
        %p298 = pneg %p62
        %p299 = pneg %p59
        %p300 = pneg %p83
        %p301 = pneg %p80
        %p302 = pneg %p104
        %p303 = pneg %p101
        %p304 = pneg %p125
        %p305 = pneg %p122
        %p306 = pneg %p146
        %p307 = pneg %p143
        %p308 = pneg %p167
        %p309 = pneg %p164
        %p310 = pneg %p193
        %p311 = pneg %p190
        %p312 = scmp.lt.s32.totalorder %s20, 1
        %s313 = scalar_select %p312, %s20, 1
        %s314 = smul.addr %s313, 8
        %s315 = scalar_lea.vmem %s7, %s314
        %p316 = scmp.lt.s32.totalorder %s20, 1
        %s317 = scalar_select %p316, %s20, 1
        %s318 = smul.addr %s317, 4
        %s319 = scalar_lea.vmem %s0, %s318
        %p320 = scmp.lt.s32.totalorder %s20, 1
        %s321 = scalar_select %p320, %s20, 1
        %s322 = smul.addr %s321, 8
        %s323 = scalar_lea.vmem %s7, %s322
        %v324 = vld [vmem:[%s319] sm:$0xf]
        %v325 = vld [vmem:[#allocation2] sm:$0xf]
        %v326 = vld [vmem:[#allocation2 + $0x4] sm:$0xf]
        %v327 = vld [vmem:[#allocation2 + $0x8] sm:$0xf]
        %v328 = vld [vmem:[#allocation2 + $0xc] sm:$0xf]
        %v329 = vld [vmem:[#allocation2 + $0x10] sm:$0xf]
        %v330 = vld [vmem:[#allocation2 + $0x14] sm:$0xf]
        %v331 = vld [vmem:[#allocation2 + $0x18] sm:$0xf]
        %v332 = vld [vmem:[#allocation2 + $0x1c] sm:$0xf]
        %v333 = vld [vmem:[#allocation2 + $0x20] sm:$0xf]
        %v334 = vld [vmem:[#allocation2 + $0x24] sm:$0xf]
        %v335 = vld [vmem:[#allocation2 + $0x28] sm:$0xf]
        %v336 = vld [vmem:[#allocation2 + $0x2c] sm:$0xf]
        %v337 = vld [vmem:[#allocation2 + $0x30] sm:$0xf]
        %v338 = vld [vmem:[#allocation2 + $0x34] sm:$0xf]
        %v339 = vld [vmem:[#allocation2 + $0x38] sm:$0xf]
        %v340 = vld [vmem:[#allocation2 + $0x3c] sm:$0xf]
        %v341 = vld [vmem:[%s2] sm:$0x1]
        %v343 = vperm.slane %v341, 0
        %v361 = vunpack.c.l.b16 %v325
        %v362 = vunpack.c.l.b16 %v326
        %v363 = vunpack.c.l.b16 %v327
        %v364 = vunpack.c.l.b16 %v328
        %v365 = vunpack.c.l.b16 %v329
        %v366 = vunpack.c.l.b16 %v330
        %v367 = vunpack.c.l.b16 %v331
        %v368 = vunpack.c.l.b16 %v332
        %v369 = vunpack.c.l.b16 %v333
        %v370 = vunpack.c.l.b16 %v334
        %v371 = vunpack.c.l.b16 %v335
        %v372 = vunpack.c.l.b16 %v336
        %v373 = vunpack.c.l.b16 %v337
        %v374 = vunpack.c.l.b16 %v338
        %v375 = vunpack.c.l.b16 %v339
        %v376 = vunpack.c.l.b16 %v340
        %v377 = vpack.c.b16 %v362, %v361
        %v378 = vpack.c.b16 %v364, %v363
        %v379 = vpack.c.b16 %v366, %v365
        %v380 = vpack.c.b16 %v368, %v367
        %v381 = vpack.c.b16 %v370, %v369
        %v382 = vpack.c.b16 %v372, %v371
        %v383 = vpack.c.b16 %v374, %v373
        %v384 = vpack.c.b16 %v376, %v375
        %393 = vmatpush.bf16.msra.mxu0 %v384
        %394 = vmatpush.bf16.msra.mxu0 %v383
        %395 = vmatpush.bf16.msra.mxu0 %v382
        %396 = vmatpush.bf16.msra.mxu0 %v381
        %397 = vmatpush.bf16.msra.mxu0 %v380
        %398 = vmatpush.bf16.msra.mxu0 %v379
        %399 = vmatpush.bf16.msra.mxu0 %v378
        %400 = vmatpush.bf16.msra.mxu0 %v377
        %401 = vmatmul.bf16.gmra.mxu0 %v324
        %v402 = vpop.f32.mrf.mxu0
        %v403 = vadd.f32 %v343, %v402
        %v404 = vpop.f32.mrf.mxu0
        %405 = vdwg.mxu0
        %v406 = vmax.f32 %v403, 0.0
        %v407 = vpack.c.bf16 %v406, %v406
        %v408 = vld [vmem:[#allocation4] sm:$0xf]
        %v409 = vld [vmem:[#allocation4 + $0x4] sm:$0xf]
        %v410 = vld [vmem:[#allocation4 + $0x8] sm:$0xf]
        %v411 = vld [vmem:[#allocation4 + $0xc] sm:$0xf]
        %v412 = vld [vmem:[#allocation4 + $0x10] sm:$0xf]
        %v413 = vld [vmem:[#allocation4 + $0x14] sm:$0xf]
        %v414 = vld [vmem:[#allocation4 + $0x18] sm:$0xf]
        %v415 = vld [vmem:[#allocation4 + $0x1c] sm:$0xf]
        %v416 = vld [vmem:[#allocation4 + $0x20] sm:$0xf]
        %v417 = vld [vmem:[#allocation4 + $0x24] sm:$0xf]
        %v418 = vld [vmem:[#allocation4 + $0x28] sm:$0xf]
        %v419 = vld [vmem:[#allocation4 + $0x2c] sm:$0xf]
        %v420 = vld [vmem:[#allocation4 + $0x30] sm:$0xf]
        %v421 = vld [vmem:[#allocation4 + $0x34] sm:$0xf]
        %v422 = vld [vmem:[#allocation4 + $0x38] sm:$0xf]
        %v423 = vld [vmem:[#allocation4 + $0x3c] sm:$0xf]
        %v424 = vld [vmem:[%s4] sm:$0x1]
        %v426 = vperm.slane %v424, 0
        %v444 = vunpack.c.l.b16 %v408
        %v445 = vunpack.c.l.b16 %v409
        %v446 = vunpack.c.l.b16 %v410
        %v447 = vunpack.c.l.b16 %v411
        %v448 = vunpack.c.l.b16 %v412
        %v449 = vunpack.c.l.b16 %v413
        %v450 = vunpack.c.l.b16 %v414
        %v451 = vunpack.c.l.b16 %v415
        %v452 = vunpack.c.l.b16 %v416
        %v453 = vunpack.c.l.b16 %v417
        %v454 = vunpack.c.l.b16 %v418
        %v455 = vunpack.c.l.b16 %v419
        %v456 = vunpack.c.l.b16 %v420
        %v457 = vunpack.c.l.b16 %v421
        %v458 = vunpack.c.l.b16 %v422
        %v459 = vunpack.c.l.b16 %v423
        %v460 = vpack.c.b16 %v445, %v444
        %v461 = vpack.c.b16 %v447, %v446
        %v462 = vpack.c.b16 %v449, %v448
        %v463 = vpack.c.b16 %v451, %v450
        %v464 = vpack.c.b16 %v453, %v452
        %v465 = vpack.c.b16 %v455, %v454
        %v466 = vpack.c.b16 %v457, %v456
        %v467 = vpack.c.b16 %v459, %v458
        %476 = vmatpush.bf16.msra.mxu0 %v467
        %477 = vmatpush.bf16.msra.mxu0 %v466
        %478 = vmatpush.bf16.msra.mxu0 %v465
        %479 = vmatpush.bf16.msra.mxu0 %v464
        %480 = vmatpush.bf16.msra.mxu0 %v463
        %481 = vmatpush.bf16.msra.mxu0 %v462
        %482 = vmatpush.bf16.msra.mxu0 %v461
        %483 = vmatpush.bf16.msra.mxu0 %v460
        %484 = vmatmul.bf16.gmra.mxu0 %v407
        %v485 = vpop.f32.mrf.mxu0
        %v486 = vadd.f32 %v426, %v485
        %v487 = vpop.f32.mrf.mxu0
        %488 = vdwg.mxu0
        %v489 = vmax.f32 %v486, 0.0
        %v490 = vpack.c.bf16 %v489, %v489
        %v491 = vld [vmem:[#allocation6] sm:$0xf]
        %v492 = vld [vmem:[#allocation6 + $0x4] sm:$0xf]
        %v493 = vld [vmem:[#allocation6 + $0x8] sm:$0xf]
        %v494 = vld [vmem:[#allocation6 + $0xc] sm:$0xf]
        %v495 = vld [vmem:[#allocation6 + $0x10] sm:$0xf]
        %v496 = vld [vmem:[#allocation6 + $0x14] sm:$0xf]
        %v497 = vld [vmem:[#allocation6 + $0x18] sm:$0xf]
        %v498 = vld [vmem:[#allocation6 + $0x1c] sm:$0xf]
        %v499 = vld [vmem:[#allocation6 + $0x20] sm:$0xf]
        %v500 = vld [vmem:[#allocation6 + $0x24] sm:$0xf]
        %v501 = vld [vmem:[#allocation6 + $0x28] sm:$0xf]
        %v502 = vld [vmem:[#allocation6 + $0x2c] sm:$0xf]
        %v503 = vld [vmem:[#allocation6 + $0x30] sm:$0xf]
        %v504 = vld [vmem:[#allocation6 + $0x34] sm:$0xf]
        %v505 = vld [vmem:[#allocation6 + $0x38] sm:$0xf]
        %v506 = vld [vmem:[#allocation6 + $0x3c] sm:$0xf]
        %v507 = vld [vmem:[%s6] sm:$0x1]
        %v509 = vperm.slane %v507, 0
        %v527 = vunpack.c.l.b16 %v491
        %v528 = vunpack.c.l.b16 %v492
        %v529 = vunpack.c.l.b16 %v493
        %v530 = vunpack.c.l.b16 %v494
        %v531 = vunpack.c.l.b16 %v495
        %v532 = vunpack.c.l.b16 %v496
        %v533 = vunpack.c.l.b16 %v497
        %v534 = vunpack.c.l.b16 %v498
        %v535 = vunpack.c.l.b16 %v499
        %v536 = vunpack.c.l.b16 %v500
        %v537 = vunpack.c.l.b16 %v501
        %v538 = vunpack.c.l.b16 %v502
        %v539 = vunpack.c.l.b16 %v503
        %v540 = vunpack.c.l.b16 %v504
        %v541 = vunpack.c.l.b16 %v505
        %v542 = vunpack.c.l.b16 %v506
        %v543 = vpack.c.b16 %v528, %v527
        %v544 = vpack.c.b16 %v530, %v529
        %v545 = vpack.c.b16 %v532, %v531
        %v546 = vpack.c.b16 %v534, %v533
        %v547 = vpack.c.b16 %v536, %v535
        %v548 = vpack.c.b16 %v538, %v537
        %v549 = vpack.c.b16 %v540, %v539
        %v550 = vpack.c.b16 %v542, %v541
        %559 = vmatpush.bf16.msra.mxu0 %v550
        %560 = vmatpush.bf16.msra.mxu0 %v549
        %561 = vmatpush.bf16.msra.mxu0 %v548
        %562 = vmatpush.bf16.msra.mxu0 %v547
        %563 = vmatpush.bf16.msra.mxu0 %v546
        %564 = vmatpush.bf16.msra.mxu0 %v545
        %565 = vmatpush.bf16.msra.mxu0 %v544
        %566 = vmatpush.bf16.msra.mxu0 %v543
        %567 = vmatmul.bf16.gmra.mxu0 %v490
        %v568 = vpop.f32.mrf.mxu0
        %v569 = vadd.f32 %v509, %v568
        %v570 = vpop.f32.mrf.mxu0
        %571 = vdwg.mxu0
        %572 = vst [vmem:[%s323] sm:$0xff] %v569
        %p573 = scmp.lt.s32.totalorder %s20, 1
        %s574 = scalar_select %p573, %s20, 1
        %s575 = smul.addr %s574, 8
        %s576 = scalar_lea.vmem %s7, %s575
        // Predicated region
        $region61: #{general_nn_forward.1} parent=47 // pred_check
          %p577 = pneg %p190
        $region62: #{general_nn_forward.1} parent=47 // pred_check_branch
          %579 = sbr.rel (%p577) target = $region64
        $region63: #{general_nn_forward.1} parent=47 // pred_region
          _
        $region64: #{general_nn_forward.1} parent=47 // pred_fallthru
          _
      $region48: #{general_nn_forward.1} parent=5 // pred_fallthru
        _
      %p580 = scmp.le.s32.totalorder 2, %s15
      // Predicated region
      $region65: #{general_nn_forward.1} parent=5 // pred_check
        %p581 = pneg %p580
      $region66: #{general_nn_forward.1} parent=5 // pred_check_branch
        %583 = sbr.rel (%p581) target = $region68
      $region67: #{general_nn_forward.1} parent=5 // pred_region
        %s584 = ssub.s32 %s15, 2
        // Predicated region
        $region69: #{general_nn_forward.1} parent=67 // pred_check
          %p585 = pneg %p196
        $region70: #{general_nn_forward.1} parent=67 // pred_check_branch
          %587 = sbr.rel (%p585) target = $region72
        $region71: #{general_nn_forward.1} parent=67 // pred_region
          %p588 = scmp.lt.s32.totalorder %s21, 1
          %s589 = scalar_select %p588, %s21, 1
          %s590 = smul.addr %s589, 8
          %s591 = scalar_lea.vmem %s7, %s590
        $region72: #{general_nn_forward.1} parent=67 // pred_fallthru
          _
      $region68: #{general_nn_forward.1} parent=5 // pred_fallthru
        _
    $region6: #{general_nn_forward.1} parent=1 // loop_footer
      %s19 = sadd.s32 1, %s15
    $region7: #{general_nn_forward.1} parent=1 // loop_footer_branch
      %14 = sbr.rel target = $region3
    $region8: #{general_nn_forward.1} parent=1 // loop_exit
      _
    %592 = vsyncpa [#allocation3], 1
    %s593 = scalar_lea.sflag [#allocation3], 1
    %594 = vsyncpa %s593, 1
    %595 = vsyncpa [#allocation5], 1

</llo_original>
